<compile_context>
chip_gen: v6e
topology: v6e:2x2x1
jax: 0.10.0
libtpu: 0.0.40
codegen_flags: <defaults>
</compile_context>

<pallas_src>
import functools

import jax
import jax.numpy as jnp
from jax.experimental import pallas as pl
from jax.experimental.pallas import tpu as pltpu


def _round_up(x, m):
  return ((x + m - 1) // m) * m


# ----------------------------------------------------------------------------
# Pallas kernel: one (tm, 128) output tile; full K in a single block.
# ----------------------------------------------------------------------------
def _linear_kernel(x_ref, w_ref, b_ref, o_ref):
  o_ref[...] = (
      jnp.dot(x_ref[...], w_ref[...], preferred_element_type=jnp.float32)
      + b_ref[...]
  ).astype(o_ref.dtype)


# ----------------------------------------------------------------------------
# Parameter preparation (done once, outside the traced forward).
# ----------------------------------------------------------------------------
def prepare_linear_params(w_oi, b_o, *, tn=128):
  """PyTorch Linear params (w:[out,in], b:[out]) -> padded kernel operands."""
  out_f, in_f = w_oi.shape
  np_ = _round_up(out_f, tn)
  w_mat = jnp.transpose(w_oi.astype(jnp.float32), (1, 0))      # [in, out]
  w_mat = jnp.pad(w_mat, ((0, 0), (0, np_ - out_f)))           # [in, np_]
  b_row = jnp.pad(b_o.astype(jnp.float32), (0, np_ - out_f)).reshape(1, np_)
  return w_mat, b_row, out_f


# ----------------------------------------------------------------------------
# Forward: y = x @ W^T + b via a single-axis (M) Pallas grid.
# ----------------------------------------------------------------------------
def linear_forward(x, w_mat, b_row, out_features, *, tm=512):
  m, k = x.shape
  kp, np_ = w_mat.shape
  assert k == kp and np_ % 128 == 0

  # M tile: big (512) for HBM-roofline efficiency, clamped for tiny batches,
  # multiple of 8 (f32 sublane).  For medium/large batches, cap so the M grid
  # has >= 2 steps (keeps both v7x TensorCores busy on the "parallel" axis).
  tm_eff = min(tm, _round_up(m, 8))
  if m >= 256:
    tm_eff = min(tm_eff, _round_up(pl.cdiv(m, 2), 8))
  mp = _round_up(m, tm_eff)

  xp = x if mp == m else jnp.pad(x, ((0, mp - m), (0, 0)))

  grid = (mp // tm_eff,)
  out = pl.pallas_call(
      _linear_kernel,
      out_shape=jax.ShapeDtypeStruct((mp, np_), jnp.float32),
      grid_spec=pltpu.PrefetchScalarGridSpec(
          num_scalar_prefetch=0,
          grid=grid,
          in_specs=[
              pl.BlockSpec((tm_eff, kp), lambda i: (i, 0)),
              pl.BlockSpec((kp, np_), lambda i: (0, 0)),   # resident, DMA once
              pl.BlockSpec((1, np_), lambda i: (0, 0)),    # resident, DMA once
          ],
          out_specs=pl.BlockSpec((tm_eff, np_), lambda i: (i, 0)),
      ),
      compiler_params=pltpu.CompilerParams(
          dimension_semantics=("parallel",)),
  )(xp, w_mat, b_row)
  return out[:m, :out_features]


def res_classifier_forward(x, w_oi, b_o):
  """Convenience wrapper mirroring ResClassifier.forward (prep + linear).

  Note: prepares (transposes/pads) the weights on every call; for repeated
  use, call prepare_linear_params once and reuse linear_forward directly.
  """
  w_mat, b_row, out_f = prepare_linear_params(w_oi, b_o)
  return linear_forward(x, w_mat, b_row, out_f)


# ----------------------------------------------------------------------------
if __name__ == "__main__":
  key = jax.random.PRNGKey(0)
  kx, kw, kb = jax.random.split(key, 3)

  batch, in_features, out_features = 4, 512, 10
  x = jax.random.normal(kx, (batch, in_features), jnp.float32)

  # PyTorch nn.Linear default init: U(-1/sqrt(fan_in), 1/sqrt(fan_in)).
  bound = 1.0 / (in_features ** 0.5)
  w = jax.random.uniform(kw, (out_features, in_features), jnp.float32,
                         -bound, bound)
  b = jax.random.uniform(kb, (out_features,), jnp.float32, -bound, bound)

  # Prepare (transpose / pad) parameters once, outside the jit.
  w_mat, b_row, out_f = prepare_linear_params(w, b)
  fwd = jax.jit(functools.partial(
      linear_forward, w_mat=w_mat, b_row=b_row, out_features=out_f))

  out = jax.block_until_ready(fwd(x))

  assert out.shape == (batch, out_features), out.shape
  assert out.dtype == jnp.float32
  assert bool(jnp.all(jnp.isfinite(out)))

  # Reference check: f32 matmul on the MXU -> tight tolerance.
  ref = x @ w.T + b
  max_err = float(jnp.max(jnp.abs(out - ref)))
  assert max_err < 1e-3, max_err

  print("KERNEL_OK")
</pallas_src>

<mosaic_0001>
module attributes {stable_mosaic.version = 11 : i64} {
  func.func @_linear_kernel(%arg0: i32, %arg1: memref<8x512xf32, #tpu.memory_space<vmem>>, %arg2: memref<512x128xf32, #tpu.memory_space<vmem>>, %arg3: memref<1x128xf32, #tpu.memory_space<vmem>>, %arg4: memref<8x128xf32, #tpu.memory_space<vmem>>) attributes {dimension_semantics = [#tpu.dimension_semantics<parallel>], iteration_bounds = array<i64: 1>, scalar_prefetch = 0 : i64, scratch_operands = 0 : i64, tpu.core_type = #tpu.core_type<tc>, window_params = [{transform_indices = @transform_0, window_bounds = array<i64: 8, 512>}, {pipeline_mode = #tpu.pipeline_mode<synchronous>, transform_indices = @transform_1, window_bounds = array<i64: 512, 128>}, {pipeline_mode = #tpu.pipeline_mode<synchronous>, transform_indices = @transform_2, window_bounds = array<i64: 1, 128>}, {transform_indices = @transform_3, window_bounds = array<i64: 8, 128>}]} {
    %c0 = arith.constant 0 : index
    %c0_0 = arith.constant 0 : index
    %0 = vector.load %arg1[%c0, %c0_0] : memref<8x512xf32, #tpu.memory_space<vmem>>, vector<8x512xf32>
    %c0_1 = arith.constant 0 : index
    %c0_2 = arith.constant 0 : index
    %1 = vector.load %arg2[%c0_1, %c0_2] : memref<512x128xf32, #tpu.memory_space<vmem>>, vector<512x128xf32>
    %cst = arith.constant dense<0.000000e+00> : vector<8x128xf32>
    %2 = tpu.matmul %0, %1, %cst {dimension_numbers = #tpu.dot_dimension_numbers<[1], [0], [0], [1], [0, 0, 1, 1], [], []>} : vector<8x512xf32>, vector<512x128xf32>, vector<8x128xf32> -> vector<8x128xf32>
    %c0_3 = arith.constant 0 : index
    %c0_4 = arith.constant 0 : index
    %3 = vector.load %arg3[%c0_3, %c0_4] : memref<1x128xf32, #tpu.memory_space<vmem>>, vector<1x128xf32>
    %4 = vector.broadcast %3 : vector<1x128xf32> to vector<8x128xf32>
    %5 = arith.addf %2, %4 : vector<8x128xf32>
    %c0_5 = arith.constant 0 : index
    %c0_6 = arith.constant 0 : index
    %6 = vector.load %arg4[%c0_5, %c0_6] : memref<8x128xf32, #tpu.memory_space<vmem>>, vector<8x128xf32>
    tpu.vector_store %arg4[%c0_5, %c0_6], %5 {strides = array<i32>} : memref<8x128xf32, #tpu.memory_space<vmem>>, vector<8x128xf32>,
    return
  }
  func.func @transform_0(%arg0: i32) -> (i32, i32) {
    %c0_i32 = arith.constant 0 : i32
    %c0_i32_0 = arith.constant 0 : i32
    return %arg0, %c0_i32 : i32, i32
  }
  func.func @transform_1(%arg0: i32) -> (i32, i32) {
    %c0_i32 = arith.constant 0 : i32
    %c0_i32_0 = arith.constant 0 : i32
    %c0_i32_1 = arith.constant 0 : i32
    return %c0_i32, %c0_i32_0 : i32, i32
  }
  func.func @transform_2(%arg0: i32) -> (i32, i32) {
    %c0_i32 = arith.constant 0 : i32
    %c0_i32_0 = arith.constant 0 : i32
    %c0_i32_1 = arith.constant 0 : i32
    return %c0_i32, %c0_i32_0 : i32, i32
  }
  func.func @transform_3(%arg0: i32) -> (i32, i32) {
    %c0_i32 = arith.constant 0 : i32
    %c0_i32_0 = arith.constant 0 : i32
    return %arg0, %c0_i32 : i32, i32
  }
}

</mosaic_0001>

<llo_original>
// kernel: linear_forward.1
$region0: #{linear_forward.1}
  #allocation0 [shape = 'u32[]', space=smem, size = 0x4, offset = 0x4, fixed_abs, tag = 'smem constant byte address 0x4 - core index']
  #allocation1 [shape = 'u32[144,128]{1,0:T(1,128)}', space=vmem, size = 0x12000, scoped, tag = 'internal scratch']
  %s0 = inlined_call_operand.vmem [shape: f32[8,512], index: 0, kind: input, shape index: {}]
  %s1 = inlined_call_operand.hbm [shape: f32[512,128], index: 1, kind: input, shape index: {}]
  %s2 = inlined_call_operand.vmem [shape: f32[1,128], index: 2, kind: input, shape index: {}]
  %s3 = inlined_call_operand.vmem [shape: f32[8,128], index: 3, kind: output, shape index: {}]
  %s4 = sld [smem:[#allocation0]]
  $region26: #{linear_forward.1} parent=0
    _
  %s6 = ssub.s32 1, %s4
  %s7 = scalar_select 0, %s6, %s4
  $region1: #{linear_forward.1} parent=0
    #allocation2 [shape = 'u8[262144]{0}', space=vmem, size = 0x40000, scoped, tag = 'input window, operand 1, single buffered']
    #allocation3 [shape = 's32[1]{0}', space=sflag, size = 0x4, scoped, tag = 'scoped memory for linear_forward.1']
    %8 = vsyncpa [#allocation3], 0
    // Predicated region
    $region2: #{linear_forward.1} parent=1 // pred_check
      _
    $region3: #{linear_forward.1} parent=1 // pred_check_branch
      %10 = sbr.rel (0) target = $region5
    $region4: #{linear_forward.1} parent=1 // pred_region
      _
    $region5: #{linear_forward.1} parent=1 // pred_fallthru
      _
    // Predicated region
    $region6: #{linear_forward.1} parent=1 // pred_check
      _
    $region7: #{linear_forward.1} parent=1 // pred_check_branch
      %12 = sbr.rel (0) target = $region9
    $region8: #{linear_forward.1} parent=1 // pred_region
      %s14 = ssub.s32 8192, 8192
      %15 = vsyncadd [#allocation3], %s14
      %s16 = sshll.u32 [#allocation2], 4
      %s17 = int_to_ptr.vmem [resolvable:$true] %s16
      %22 = dma.hbm_to_vmem [thread:$0]  %s1, 8192, %s17, [#allocation3], 128, 128, 8
    $region9: #{linear_forward.1} parent=1 // pred_fallthru
      _
    // Predicated region
    $region10: #{linear_forward.1} parent=1 // pred_check
      _
    $region11: #{linear_forward.1} parent=1 // pred_check_branch
      %24 = sbr.rel (0) target = $region13
    $region12: #{linear_forward.1} parent=1 // pred_region
      _
    $region13: #{linear_forward.1} parent=1 // pred_fallthru
      _
    // Predicated region
    $region14: #{linear_forward.1} parent=1 // pred_check
      _
    $region15: #{linear_forward.1} parent=1 // pred_check_branch
      %26 = sbr.rel (0) target = $region17
    $region16: #{linear_forward.1} parent=1 // pred_region
      %27 = dma.done [#allocation3], 8192
    $region17: #{linear_forward.1} parent=1 // pred_fallthru
      _
    %v28 = vld [vmem:[%s0] sm:$0xff]
    %v29 = vld [vmem:[%s0 + $0x8] sm:$0xff]
    %v30 = vld [vmem:[%s0 + $0x10] sm:$0xff]
    %v31 = vld [vmem:[%s0 + $0x18] sm:$0xff]
    %v32 = vld [vmem:[#allocation2] sm:$0xff]
    %v33 = vld [vmem:[#allocation2 + $0x8] sm:$0xff]
    %v34 = vld [vmem:[#allocation2 + $0x10] sm:$0xff]
    %v35 = vld [vmem:[#allocation2 + $0x18] sm:$0xff]
    %v36 = vld [vmem:[#allocation2 + $0x20] sm:$0xff]
    %v37 = vld [vmem:[#allocation2 + $0x28] sm:$0xff]
    %v38 = vld [vmem:[#allocation2 + $0x30] sm:$0xff]
    %v39 = vld [vmem:[#allocation2 + $0x38] sm:$0xff]
    %v40 = vld [vmem:[#allocation2 + $0x40] sm:$0xff]
    %v41 = vld [vmem:[#allocation2 + $0x48] sm:$0xff]
    %v42 = vld [vmem:[#allocation2 + $0x50] sm:$0xff]
    %v43 = vld [vmem:[#allocation2 + $0x58] sm:$0xff]
    %v44 = vld [vmem:[#allocation2 + $0x60] sm:$0xff]
    %v45 = vld [vmem:[#allocation2 + $0x68] sm:$0xff]
    %v46 = vld [vmem:[#allocation2 + $0x70] sm:$0xff]
    %v47 = vld [vmem:[#allocation2 + $0x78] sm:$0xff]
    %v48 = vld [vmem:[#allocation2 + $0x80] sm:$0xff]
    %v49 = vld [vmem:[#allocation2 + $0x88] sm:$0xff]
    %v50 = vld [vmem:[#allocation2 + $0x90] sm:$0xff]
    %v51 = vld [vmem:[#allocation2 + $0x98] sm:$0xff]
    %v52 = vld [vmem:[#allocation2 + $0xa0] sm:$0xff]
    %v53 = vld [vmem:[#allocation2 + $0xa8] sm:$0xff]
    %v54 = vld [vmem:[#allocation2 + $0xb0] sm:$0xff]
    %v55 = vld [vmem:[#allocation2 + $0xb8] sm:$0xff]
    %v56 = vld [vmem:[#allocation2 + $0xc0] sm:$0xff]
    %v57 = vld [vmem:[#allocation2 + $0xc8] sm:$0xff]
    %v58 = vld [vmem:[#allocation2 + $0xd0] sm:$0xff]
    %v59 = vld [vmem:[#allocation2 + $0xd8] sm:$0xff]
    %v60 = vld [vmem:[#allocation2 + $0xe0] sm:$0xff]
    %v61 = vld [vmem:[#allocation2 + $0xe8] sm:$0xff]
    %v62 = vld [vmem:[#allocation2 + $0xf0] sm:$0xff]
    %v63 = vld [vmem:[#allocation2 + $0xf8] sm:$0xff]
    %v64 = vld [vmem:[#allocation2 + $0x100] sm:$0xff]
    %v65 = vld [vmem:[#allocation2 + $0x108] sm:$0xff]
    %v66 = vld [vmem:[#allocation2 + $0x110] sm:$0xff]
    %v67 = vld [vmem:[#allocation2 + $0x118] sm:$0xff]
    %v68 = vld [vmem:[#allocation2 + $0x120] sm:$0xff]
    %v69 = vld [vmem:[#allocation2 + $0x128] sm:$0xff]
    %v70 = vld [vmem:[#allocation2 + $0x130] sm:$0xff]
    %v71 = vld [vmem:[#allocation2 + $0x138] sm:$0xff]
    %v72 = vld [vmem:[#allocation2 + $0x140] sm:$0xff]
    %v73 = vld [vmem:[#allocation2 + $0x148] sm:$0xff]
    %v74 = vld [vmem:[#allocation2 + $0x150] sm:$0xff]
    %v75 = vld [vmem:[#allocation2 + $0x158] sm:$0xff]
    %v76 = vld [vmem:[#allocation2 + $0x160] sm:$0xff]
    %v77 = vld [vmem:[#allocation2 + $0x168] sm:$0xff]
    %v78 = vld [vmem:[#allocation2 + $0x170] sm:$0xff]
    %v79 = vld [vmem:[#allocation2 + $0x178] sm:$0xff]
    %v80 = vld [vmem:[#allocation2 + $0x180] sm:$0xff]
    %v81 = vld [vmem:[#allocation2 + $0x188] sm:$0xff]
    %v82 = vld [vmem:[#allocation2 + $0x190] sm:$0xff]
    %v83 = vld [vmem:[#allocation2 + $0x198] sm:$0xff]
    %v84 = vld [vmem:[#allocation2 + $0x1a0] sm:$0xff]
    %v85 = vld [vmem:[#allocation2 + $0x1a8] sm:$0xff]
    %v86 = vld [vmem:[#allocation2 + $0x1b0] sm:$0xff]
    %v87 = vld [vmem:[#allocation2 + $0x1b8] sm:$0xff]
    %v88 = vld [vmem:[#allocation2 + $0x1c0] sm:$0xff]
    %v89 = vld [vmem:[#allocation2 + $0x1c8] sm:$0xff]
    %v90 = vld [vmem:[#allocation2 + $0x1d0] sm:$0xff]
    %v91 = vld [vmem:[#allocation2 + $0x1d8] sm:$0xff]
    %v92 = vld [vmem:[#allocation2 + $0x1e0] sm:$0xff]
    %v93 = vld [vmem:[#allocation2 + $0x1e8] sm:$0xff]
    %v94 = vld [vmem:[#allocation2 + $0x1f0] sm:$0xff]
    %v95 = vld [vmem:[#allocation2 + $0x1f8] sm:$0xff]
    %v96 = vld [vmem:[%s2] sm:$0x1]
    %v98 = vlaneseq
    %v99 = vshrl.u32 %v98, 7
    %v100 = vsub.s32 0, %v99
    %v101 = vrot.slane %v96, %v100
    %103 = vmatprep.subr.mxu0 0.0
    %104 = vmatpush1.msra.mxu0 %v47
    %105 = vmatprep.subr.mxu0 0.0
    %106 = vmatpush1.msra.mxu0 %v46
    %107 = vmatprep.subr.mxu0 0.0
    %108 = vmatpush1.msra.mxu0 %v45
    %109 = vmatprep.subr.mxu0 0.0
    %110 = vmatpush1.msra.mxu0 %v44
    %111 = vmatprep.subr.mxu0 0.0
    %112 = vmatpush1.msra.mxu0 %v43
    %113 = vmatprep.subr.mxu0 0.0
    %114 = vmatpush1.msra.mxu0 %v42
    %115 = vmatprep.subr.mxu0 0.0
    %116 = vmatpush1.msra.mxu0 %v41
    %117 = vmatprep.subr.mxu0 0.0
    %118 = vmatpush1.msra.mxu0 %v40
    %119 = vmatprep.subr.mxu0 0.0
    %120 = vmatpush1.msra.mxu0 %v39
    %121 = vmatprep.subr.mxu0 0.0
    %122 = vmatpush1.msra.mxu0 %v38
    %123 = vmatprep.subr.mxu0 0.0
    %124 = vmatpush1.msra.mxu0 %v37
    %125 = vmatprep.subr.mxu0 0.0
    %126 = vmatpush1.msra.mxu0 %v36
    %127 = vmatprep.subr.mxu0 0.0
    %128 = vmatpush1.msra.mxu0 %v35
    %129 = vmatprep.subr.mxu0 0.0
    %130 = vmatpush1.msra.mxu0 %v34
    %131 = vmatprep.subr.mxu0 0.0
    %132 = vmatpush1.msra.mxu0 %v33
    %133 = vmatprep.subr.mxu0 0.0
    %134 = vmatpush1.msra.mxu0 %v32
    %135 = vmatprep.subr.mxu0 0.0
    %136 = vmatpush2.msra.mxu0 %v63
    %137 = vmatprep.subr.mxu0 0.0
    %138 = vmatpush2.msra.mxu0 %v62
    %139 = vmatprep.subr.mxu0 0.0
    %140 = vmatpush2.msra.mxu0 %v61
    %141 = vmatprep.subr.mxu0 0.0
    %142 = vmatpush2.msra.mxu0 %v60
    %143 = vmatprep.subr.mxu0 0.0
    %144 = vmatpush2.msra.mxu0 %v59
    %145 = vmatprep.subr.mxu0 0.0
    %146 = vmatpush2.msra.mxu0 %v58
    %147 = vmatprep.subr.mxu0 0.0
    %148 = vmatpush2.msra.mxu0 %v57
    %149 = vmatprep.subr.mxu0 0.0
    %150 = vmatpush2.msra.mxu0 %v56
    %151 = vmatprep.subr.mxu0 0.0
    %152 = vmatpush2.msra.mxu0 %v55
    %153 = vmatprep.subr.mxu0 0.0
    %154 = vmatpush2.msra.mxu0 %v54
    %155 = vmatprep.subr.mxu0 0.0
    %156 = vmatpush2.msra.mxu0 %v53
    %157 = vmatprep.subr.mxu0 0.0
    %158 = vmatpush2.msra.mxu0 %v52
    %159 = vmatprep.subr.mxu0 0.0
    %160 = vmatpush2.msra.mxu0 %v51
    %161 = vmatprep.subr.mxu0 0.0
    %162 = vmatpush2.msra.mxu0 %v50
    %163 = vmatprep.subr.mxu0 0.0
    %164 = vmatpush2.msra.mxu0 %v49
    %165 = vmatprep.subr.mxu0 0.0
    %166 = vmatpush2.msra.mxu0 %v48
    %167 = vmatprep.mubr.f32.mxu0 %v29
    %168 = vmatmul.mubr.f32.gmra.mxu0 %v28
    %v169 = vpop.f32.mrf.mxu0
    %v170 = vadd.f32 %v101, %v169
    %v171 = vpop.f32.mrf.mxu0
    %172 = vdwg.mxu0
    %173 = vmatprep.subr.mxu0 0.0
    %174 = vmatpush1.msra.mxu0 %v79
    %175 = vmatprep.subr.mxu0 0.0
    %176 = vmatpush1.msra.mxu0 %v78
    %177 = vmatprep.subr.mxu0 0.0
    %178 = vmatpush1.msra.mxu0 %v77
    %179 = vmatprep.subr.mxu0 0.0
    %180 = vmatpush1.msra.mxu0 %v76
    %181 = vmatprep.subr.mxu0 0.0
    %182 = vmatpush1.msra.mxu0 %v75
    %183 = vmatprep.subr.mxu0 0.0
    %184 = vmatpush1.msra.mxu0 %v74
    %185 = vmatprep.subr.mxu0 0.0
    %186 = vmatpush1.msra.mxu0 %v73
    %187 = vmatprep.subr.mxu0 0.0
    %188 = vmatpush1.msra.mxu0 %v72
    %189 = vmatprep.subr.mxu0 0.0
    %190 = vmatpush1.msra.mxu0 %v71
    %191 = vmatprep.subr.mxu0 0.0
    %192 = vmatpush1.msra.mxu0 %v70
    %193 = vmatprep.subr.mxu0 0.0
    %194 = vmatpush1.msra.mxu0 %v69
    %195 = vmatprep.subr.mxu0 0.0
    %196 = vmatpush1.msra.mxu0 %v68
    %197 = vmatprep.subr.mxu0 0.0
    %198 = vmatpush1.msra.mxu0 %v67
    %199 = vmatprep.subr.mxu0 0.0
    %200 = vmatpush1.msra.mxu0 %v66
    %201 = vmatprep.subr.mxu0 0.0
    %202 = vmatpush1.msra.mxu0 %v65
    %203 = vmatprep.subr.mxu0 0.0
    %204 = vmatpush1.msra.mxu0 %v64
    %205 = vmatprep.subr.mxu0 0.0
    %206 = vmatpush2.msra.mxu0 %v95
    %207 = vmatprep.subr.mxu0 0.0
    %208 = vmatpush2.msra.mxu0 %v94
    %209 = vmatprep.subr.mxu0 0.0
    %210 = vmatpush2.msra.mxu0 %v93
    %211 = vmatprep.subr.mxu0 0.0
    %212 = vmatpush2.msra.mxu0 %v92
    %213 = vmatprep.subr.mxu0 0.0
    %214 = vmatpush2.msra.mxu0 %v91
    %215 = vmatprep.subr.mxu0 0.0
    %216 = vmatpush2.msra.mxu0 %v90
    %217 = vmatprep.subr.mxu0 0.0
    %218 = vmatpush2.msra.mxu0 %v89
    %219 = vmatprep.subr.mxu0 0.0
    %220 = vmatpush2.msra.mxu0 %v88
    %221 = vmatprep.subr.mxu0 0.0
    %222 = vmatpush2.msra.mxu0 %v87
    %223 = vmatprep.subr.mxu0 0.0
    %224 = vmatpush2.msra.mxu0 %v86
    %225 = vmatprep.subr.mxu0 0.0
    %226 = vmatpush2.msra.mxu0 %v85
    %227 = vmatprep.subr.mxu0 0.0
    %228 = vmatpush2.msra.mxu0 %v84
    %229 = vmatprep.subr.mxu0 0.0
    %230 = vmatpush2.msra.mxu0 %v83
    %231 = vmatprep.subr.mxu0 0.0
    %232 = vmatpush2.msra.mxu0 %v82
    %233 = vmatprep.subr.mxu0 0.0
    %234 = vmatpush2.msra.mxu0 %v81
    %235 = vmatprep.subr.mxu0 0.0
    %236 = vmatpush2.msra.mxu0 %v80
    %237 = vmatprep.mubr.f32.mxu0 %v31
    %238 = vmatmul.mubr.f32.gmra.mxu0 %v30
    %v239 = vpop.f32.mrf.mxu0
    %v240 = vadd.f32 %v170, %v239
    %v241 = vpop.f32.mrf.mxu0
    %242 = vdwg.mxu0
    %243 = vst [vmem:[%s3] sm:$0xff] %v240
    // Predicated region
    $region18: #{linear_forward.1} parent=1 // pred_check
      _
    $region19: #{linear_forward.1} parent=1 // pred_check_branch
      %245 = sbr.rel (0) target = $region21
    $region20: #{linear_forward.1} parent=1 // pred_region
      _
    $region21: #{linear_forward.1} parent=1 // pred_fallthru
      _
    // Predicated region
    $region22: #{linear_forward.1} parent=1 // pred_check
      _
    $region23: #{linear_forward.1} parent=1 // pred_check_branch
      %247 = sbr.rel (0) target = $region25
    $region24: #{linear_forward.1} parent=1 // pred_region
      _
    $region25: #{linear_forward.1} parent=1 // pred_fallthru
      _
    %248 = vsyncpa [#allocation3], 1

</llo_original>
